<compile_context>
chip_gen: v7x
topology: tpu7x:2x2x1
jax: 0.10.0
libtpu: 0.0.40
codegen_flags: <defaults>
</compile_context>

<pallas_src>
import functools

import jax
import jax.numpy as jnp
import numpy as np
from jax import lax
from jax.experimental import pallas as pl
from jax.experimental.pallas import tpu as pltpu


def _combined_loss_kernel(x_ref, t_ref, z1_ref, z2_ref, z3_ref,
                          z2t_ref, z3t_ref,
                          col_ref, scal_ref):
    """One batch-row tile: MSE partial + 3-pair contrastive partials."""
    # ---- MSE partial sum over this tile -------------------------------------
    d = x_ref[...] - t_ref[...]                                # (TB, G) f32
    sq = jnp.sum(d * d, axis=-1, keepdims=True)                # (TB, 1)
    sq_sum = jnp.sum(sq, axis=0, keepdims=True)                # (1, 1)

    # ---- contrastive partials ------------------------------------------------
    # z1/z2/z3: (TB, D) bf16 rows of this tile, already L2-normalized and
    # scaled by 1/sqrt(T).  z2t/z3t: (D, B) bf16 residents (pre-transposed).
    z1 = z1_ref[...]
    z2 = z2_ref[...]
    z3 = z3_ref[...]
    z2t = z2t_ref[...]
    z3t = z3t_ref[...]

    def pair(z_rows, zt_cols, z_rows_other):
        # S = z_rows @ zt_cols: (TB, B) f32 logits, |S| <= 1/T (bounded), so
        # exp() needs no max-subtraction and E is shared by both CE directions.
        s = jnp.dot(z_rows, zt_cols,
                    preferred_element_type=jnp.float32)        # MXU bf16 in / f32 acc
        e = jnp.exp(s)                                         # (TB, B)
        row_lse = jnp.log(jnp.sum(e, axis=-1, keepdims=True))  # (TB, 1) row-dir LSE
        col_sum = jnp.sum(e, axis=0, keepdims=True)            # (1, B) col partial
        diag = jnp.sum(z_rows.astype(jnp.float32) *
                       z_rows_other.astype(jnp.float32),
                       axis=-1, keepdims=True)                 # (TB, 1) positive logits
        return row_lse, col_sum, diag

    rl12, cs12, dg12 = pair(z1, z2t, z2)
    rl13, cs13, dg13 = pair(z1, z3t, z3)
    rl23, cs23, dg23 = pair(z2, z3t, z3)

    row_lse_sum = jnp.sum(rl12 + rl13 + rl23, axis=0, keepdims=True)   # (1, 1)
    diag_sum = jnp.sum(dg12 + dg13 + dg23, axis=0, keepdims=True)      # (1, 1)

    # One store for the per-pair column partial sums of exp(S).
    b = cs12.shape[-1]
    pair_idx = lax.broadcasted_iota(jnp.int32, (3, b), 0)
    col_ref[0, :, :] = jnp.where(pair_idx == 0, cs12,
                                 jnp.where(pair_idx == 1, cs13, cs23))

    # One lane-dense (1, 128) store for the three scalar partials.
    lane = lax.broadcasted_iota(jnp.int32, (1, 128), 1)
    scal_ref[0, :, :] = (jnp.where(lane == 0, sq_sum, 0.0)
                         + jnp.where(lane == 1, row_lse_sum, 0.0)
                         + jnp.where(lane == 2, diag_sum, 0.0))


def _choose_block(b, target):
    """Largest row tile <= target dividing b, preferring MXU-aligned sizes."""
    if b <= target:
        return b
    for align in (256, 128, 16, 8):
        tb = (min(target, b) // align) * align
        while tb >= align:
            if b % tb == 0:
                return tb
            tb -= align
    return b  # fall back to a single whole-batch tile


def _vmem_limit_bytes():
    """~75% of this chip's per-core VMEM (64 MiB on v7x, 128 MiB on v5e/v6e)."""
    try:
        cap = pltpu.get_tpu_info().vmem_capacity_bytes
    except Exception:
        cap = 64 * 1024 * 1024
    return max(32 * 1024 * 1024, (int(cap) * 3) // 4)


@functools.partial(jax.jit,
                   static_argnames=("temperature", "contrastive_weight", "block_b"))
def combined_loss(inputs, targets, feature1, feature2, feature3,
                  temperature=0.5, contrastive_weight=1.0, block_b=256):
    inputs = inputs.reshape(inputs.shape[0], -1).astype(jnp.float32)
    targets = targets.reshape(targets.shape[0], -1).astype(jnp.float32)

    B, G = inputs.shape
    D = feature1.shape[-1]
    assert targets.shape == (B, G)
    assert feature1.shape == (B, D) and feature2.shape == (B, D) \
        and feature3.shape == (B, D)
    # No-max logsumexp in the kernel needs bounded logits (|logit| <= 1/T).
    # TODO(synk): restore a max-subtracting path for pathologically small T.
    assert temperature >= 0.02, "no-max logsumexp requires temperature >= 0.02"

    # L2-normalize ONCE, fold in 1/sqrt(T), cast to bf16 for the MXU.
    inv_scale = 1.0 / (float(temperature) ** 0.5)

    def _norm(f):
        f = f.astype(jnp.float32)
        n = jnp.sqrt(jnp.sum(f * f, axis=-1, keepdims=True))
        return (f * (inv_scale / jnp.maximum(n, 1e-12))).astype(jnp.bfloat16)

    z1, z2, z3 = _norm(feature1), _norm(feature2), _norm(feature3)
    # Only the "column side" of each directed block needs a transpose, and
    # z1 never appears on the column side -> just two (D, B) residents.
    z2t, z3t = z2.T, z3.T

    TB = _choose_block(B, block_b)
    num_tiles = B // TB

    # TODO(synk): decouple the MSE (TB, G) streaming tile from the contrastive
    # row tile (second grid axis over G) when G >> D.
    in_specs = (
        pl.BlockSpec((TB, G), lambda i: (i, 0)),   # inputs   (streamed)
        pl.BlockSpec((TB, G), lambda i: (i, 0)),   # targets  (streamed)
        pl.BlockSpec((TB, D), lambda i: (i, 0)),   # z1 rows  (streamed, bf16)
        pl.BlockSpec((TB, D), lambda i: (i, 0)),   # z2 rows  (streamed, bf16)
        pl.BlockSpec((TB, D), lambda i: (i, 0)),   # z3 rows  (streamed, bf16)
        # z2^T / z3^T stay VMEM-resident across all grid steps (constant index
        # map -> fetched once).  TODO(synk): single-buffer these residents
        # (pl.Buffered(1) / memory_space=VMEM) to halve their footprint on v7x.
        pl.BlockSpec((D, B), lambda i: (0, 0)),
        pl.BlockSpec((D, B), lambda i: (0, 0)),
    )
    out_specs = (
        pl.BlockSpec((1, 3, B), lambda i: (i, 0, 0)),    # per-tile col-sums of exp
        pl.BlockSpec((1, 1, 128), lambda i: (i, 0, 0)),  # per-tile packed scalars
    )
    out_shape = (
        jax.ShapeDtypeStruct((num_tiles, 3, B), jnp.float32),
        jax.ShapeDtypeStruct((num_tiles, 1, 128), jnp.float32),
    )

    col_p, scal_p = pl.pallas_call(
        _combined_loss_kernel,
        grid=(num_tiles,),
        in_specs=in_specs,
        out_specs=out_specs,
        out_shape=out_shape,
        compiler_params=pltpu.CompilerParams(
            dimension_semantics=("parallel",),
            vmem_limit_bytes=_vmem_limit_bytes(),
        ),
    )(inputs, targets, z1, z2, z3, z2t, z3t)

    # Tiny plain-JAX epilogue: reduce per-tile partials to the three scalars.
    sq_sum = jnp.sum(scal_p[:, 0, 0])
    row_lse_sum = jnp.sum(scal_p[:, 0, 1])
    diag_sum = jnp.sum(scal_p[:, 0, 2])
    # Column-direction LSEs: accumulate exp column sums over tiles, then log.
    col_lse_sum = jnp.sum(jnp.log(jnp.sum(col_p, axis=0)))

    mse = sq_sum / float(B * G)
    # Per pair: 0.5*[mean_i(rowLSE - d) + mean_i(colLSE - d)]; sum of 3 pairs / 3.
    contrastive = (float(contrastive_weight)
                   * (row_lse_sum + col_lse_sum - 2.0 * diag_sum)) / (6.0 * B)
    total = mse + contrastive
    return total, mse, contrastive


def _reference_combined_loss(inputs, targets, f1, f2, f3, temperature, w):
    """Plain-JAX reference, faithful to the PyTorch module."""
    def _norm(x):
        n = jnp.sqrt(jnp.sum(x * x, axis=-1, keepdims=True))
        return x / jnp.maximum(n, 1e-12)

    def _clip(zi, zj):
        zi_n, zj_n = _norm(zi), _norm(zj)
        logits = jnp.matmul(zi_n, zj_n.T, precision="highest") / temperature

        def _ce(lg):
            lse = jax.scipy.special.logsumexp(lg, axis=-1)
            return jnp.mean(lse - jnp.diagonal(lg))

        return 0.5 * (_ce(logits) + _ce(logits.T))

    mse = jnp.mean((inputs - targets) ** 2)
    c = w * (_clip(f1, f2) + _clip(f1, f3) + _clip(f2, f3)) / 3.0
    return mse + c, mse, c


if __name__ == "__main__":
    B, D, G = 16, 32, 24
    temperature = 0.5
    contrastive_weight = 1.0

    key = jax.random.PRNGKey(0)
    k0, k1, k2, k3, k4 = jax.random.split(key, 5)
    inputs = jax.random.normal(k0, (B, G), jnp.float32)
    targets = jax.random.normal(k1, (B, G), jnp.float32)
    feature1 = jax.random.normal(k2, (B, D), jnp.float32)
    feature2 = jax.random.normal(k3, (B, D), jnp.float32)
    feature3 = jax.random.normal(k4, (B, D), jnp.float32)

    out = jax.block_until_ready(
        combined_loss(inputs, targets, feature1, feature2, feature3,
                      temperature=temperature,
                      contrastive_weight=contrastive_weight))

    ref = _reference_combined_loss(inputs, targets, feature1, feature2, feature3,
                                   temperature, contrastive_weight)

    # bf16 MXU operands (f32 accumulation) -> relaxed tolerance vs f32 reference.
    for got, want in zip(out, ref):
        np.testing.assert_allclose(np.asarray(got), np.asarray(want),
                                   rtol=2e-2, atol=2e-2)

    print("KERNEL_OK")
</pallas_src>

<mosaic_0001>
module attributes {stable_mosaic.version = 11 : i64} {
  func.func @_combined_loss_kernel(%arg0: i32, %arg1: memref<16x24xf32, #tpu.memory_space<vmem>>, %arg2: memref<16x24xf32, #tpu.memory_space<vmem>>, %arg3: memref<16x32xbf16, #tpu.memory_space<vmem>>, %arg4: memref<16x32xbf16, #tpu.memory_space<vmem>>, %arg5: memref<16x32xbf16, #tpu.memory_space<vmem>>, %arg6: memref<32x16xbf16, #tpu.memory_space<vmem>>, %arg7: memref<32x16xbf16, #tpu.memory_space<vmem>>, %arg8: memref<1x3x16xf32, #tpu.memory_space<vmem>>, %arg9: memref<1x1x128xf32, #tpu.memory_space<vmem>>) attributes {dimension_semantics = [#tpu.dimension_semantics<parallel>], iteration_bounds = array<i64: 1>, scalar_prefetch = 0 : i64, scratch_operands = 0 : i64, tpu.core_type = #tpu.core_type<tc>, window_params = [{transform_indices = @transform_0, window_bounds = array<i64: 16, 24>}, {transform_indices = @transform_1, window_bounds = array<i64: 16, 24>}, {transform_indices = @transform_2, window_bounds = array<i64: 16, 32>}, {transform_indices = @transform_3, window_bounds = array<i64: 16, 32>}, {transform_indices = @transform_4, window_bounds = array<i64: 16, 32>}, {pipeline_mode = #tpu.pipeline_mode<synchronous>, transform_indices = @transform_5, window_bounds = array<i64: 32, 16>}, {pipeline_mode = #tpu.pipeline_mode<synchronous>, transform_indices = @transform_6, window_bounds = array<i64: 32, 16>}, {transform_indices = @transform_7, window_bounds = array<i64: 1, 3, 16>}, {transform_indices = @transform_8, window_bounds = array<i64: 1, 1, 128>}]} {
    %c0 = arith.constant 0 : index
    %c0_0 = arith.constant 0 : index
    %0 = vector.load %arg1[%c0, %c0_0] : memref<16x24xf32, #tpu.memory_space<vmem>>, vector<16x24xf32>
    %c0_1 = arith.constant 0 : index
    %c0_2 = arith.constant 0 : index
    %1 = vector.load %arg2[%c0_1, %c0_2] : memref<16x24xf32, #tpu.memory_space<vmem>>, vector<16x24xf32>
    %2 = arith.subf %0, %1 : vector<16x24xf32>
    %3 = arith.mulf %2, %2 : vector<16x24xf32>
    %cst = arith.constant dense<0.000000e+00> : vector<16xf32>
    %4 = vector.multi_reduction <add>, %3, %cst [1] : vector<16x24xf32> to vector<16xf32>
    %5 = vector.shape_cast %4 : vector<16xf32> to vector<16x1xf32>
    %cst_3 = arith.constant dense<0.000000e+00> : vector<1xf32>
    %6 = vector.multi_reduction <add>, %5, %cst_3 [0] : vector<16x1xf32> to vector<1xf32>
    %7 = vector.shape_cast %6 : vector<1xf32> to vector<1x1xf32>
    %c0_4 = arith.constant 0 : index
    %c0_5 = arith.constant 0 : index
    %8 = vector.load %arg3[%c0_4, %c0_5] : memref<16x32xbf16, #tpu.memory_space<vmem>>, vector<16x32xbf16>
    %c0_6 = arith.constant 0 : index
    %c0_7 = arith.constant 0 : index
    %9 = vector.load %arg4[%c0_6, %c0_7] : memref<16x32xbf16, #tpu.memory_space<vmem>>, vector<16x32xbf16>
    %c0_8 = arith.constant 0 : index
    %c0_9 = arith.constant 0 : index
    %10 = vector.load %arg5[%c0_8, %c0_9] : memref<16x32xbf16, #tpu.memory_space<vmem>>, vector<16x32xbf16>
    %c0_10 = arith.constant 0 : index
    %c0_11 = arith.constant 0 : index
    %11 = vector.load %arg6[%c0_10, %c0_11] : memref<32x16xbf16, #tpu.memory_space<vmem>>, vector<32x16xbf16>
    %c0_12 = arith.constant 0 : index
    %c0_13 = arith.constant 0 : index
    %12 = vector.load %arg7[%c0_12, %c0_13] : memref<32x16xbf16, #tpu.memory_space<vmem>>, vector<32x16xbf16>
    %cst_14 = arith.constant dense<0.000000e+00> : vector<16x16xf32>
    %13 = tpu.matmul %8, %11, %cst_14 {dimension_numbers = #tpu.dot_dimension_numbers<[1], [0], [0], [1], [0, 0, 1, 1], [], []>} : vector<16x32xbf16>, vector<32x16xbf16>, vector<16x16xf32> -> vector<16x16xf32>
    %14 = math.exp %13 : vector<16x16xf32>
    %cst_15 = arith.constant dense<0.000000e+00> : vector<16xf32>
    %15 = vector.multi_reduction <add>, %14, %cst_15 [1] : vector<16x16xf32> to vector<16xf32>
    %16 = vector.shape_cast %15 : vector<16xf32> to vector<16x1xf32>
    %17 = math.log %16 : vector<16x1xf32>
    %cst_16 = arith.constant dense<0.000000e+00> : vector<16xf32>
    %18 = vector.multi_reduction <add>, %14, %cst_16 [0] : vector<16x16xf32> to vector<16xf32>
    %19 = vector.shape_cast %18 : vector<16xf32> to vector<1x16xf32>
    %20 = arith.extf %8 : vector<16x32xbf16> to vector<16x32xf32>
    %21 = arith.extf %9 : vector<16x32xbf16> to vector<16x32xf32>
    %22 = arith.mulf %20, %21 : vector<16x32xf32>
    %cst_17 = arith.constant dense<0.000000e+00> : vector<16xf32>
    %23 = vector.multi_reduction <add>, %22, %cst_17 [1] : vector<16x32xf32> to vector<16xf32>
    %24 = vector.shape_cast %23 : vector<16xf32> to vector<16x1xf32>
    %cst_18 = arith.constant dense<0.000000e+00> : vector<16x16xf32>
    %25 = tpu.matmul %8, %12, %cst_18 {dimension_numbers = #tpu.dot_dimension_numbers<[1], [0], [0], [1], [0, 0, 1, 1], [], []>} : vector<16x32xbf16>, vector<32x16xbf16>, vector<16x16xf32> -> vector<16x16xf32>
    %26 = math.exp %25 : vector<16x16xf32>
    %cst_19 = arith.constant dense<0.000000e+00> : vector<16xf32>
    %27 = vector.multi_reduction <add>, %26, %cst_19 [1] : vector<16x16xf32> to vector<16xf32>
    %28 = vector.shape_cast %27 : vector<16xf32> to vector<16x1xf32>
    %29 = math.log %28 : vector<16x1xf32>
    %cst_20 = arith.constant dense<0.000000e+00> : vector<16xf32>
    %30 = vector.multi_reduction <add>, %26, %cst_20 [0] : vector<16x16xf32> to vector<16xf32>
    %31 = vector.shape_cast %30 : vector<16xf32> to vector<1x16xf32>
    %32 = arith.extf %8 : vector<16x32xbf16> to vector<16x32xf32>
    %33 = arith.extf %10 : vector<16x32xbf16> to vector<16x32xf32>
    %34 = arith.mulf %32, %33 : vector<16x32xf32>
    %cst_21 = arith.constant dense<0.000000e+00> : vector<16xf32>
    %35 = vector.multi_reduction <add>, %34, %cst_21 [1] : vector<16x32xf32> to vector<16xf32>
    %36 = vector.shape_cast %35 : vector<16xf32> to vector<16x1xf32>
    %cst_22 = arith.constant dense<0.000000e+00> : vector<16x16xf32>
    %37 = tpu.matmul %9, %12, %cst_22 {dimension_numbers = #tpu.dot_dimension_numbers<[1], [0], [0], [1], [0, 0, 1, 1], [], []>} : vector<16x32xbf16>, vector<32x16xbf16>, vector<16x16xf32> -> vector<16x16xf32>
    %38 = math.exp %37 : vector<16x16xf32>
    %cst_23 = arith.constant dense<0.000000e+00> : vector<16xf32>
    %39 = vector.multi_reduction <add>, %38, %cst_23 [1] : vector<16x16xf32> to vector<16xf32>
    %40 = vector.shape_cast %39 : vector<16xf32> to vector<16x1xf32>
    %41 = math.log %40 : vector<16x1xf32>
    %cst_24 = arith.constant dense<0.000000e+00> : vector<16xf32>
    %42 = vector.multi_reduction <add>, %38, %cst_24 [0] : vector<16x16xf32> to vector<16xf32>
    %43 = vector.shape_cast %42 : vector<16xf32> to vector<1x16xf32>
    %44 = arith.extf %9 : vector<16x32xbf16> to vector<16x32xf32>
    %45 = arith.extf %10 : vector<16x32xbf16> to vector<16x32xf32>
    %46 = arith.mulf %44, %45 : vector<16x32xf32>
    %cst_25 = arith.constant dense<0.000000e+00> : vector<16xf32>
    %47 = vector.multi_reduction <add>, %46, %cst_25 [1] : vector<16x32xf32> to vector<16xf32>
    %48 = vector.shape_cast %47 : vector<16xf32> to vector<16x1xf32>
    %49 = arith.addf %17, %29 : vector<16x1xf32>
    %50 = arith.addf %49, %41 : vector<16x1xf32>
    %cst_26 = arith.constant dense<0.000000e+00> : vector<1xf32>
    %51 = vector.multi_reduction <add>, %50, %cst_26 [0] : vector<16x1xf32> to vector<1xf32>
    %52 = vector.shape_cast %51 : vector<1xf32> to vector<1x1xf32>
    %53 = arith.addf %24, %36 : vector<16x1xf32>
    %54 = arith.addf %53, %48 : vector<16x1xf32>
    %cst_27 = arith.constant dense<0.000000e+00> : vector<1xf32>
    %55 = vector.multi_reduction <add>, %54, %cst_27 [0] : vector<16x1xf32> to vector<1xf32>
    %56 = vector.shape_cast %55 : vector<1xf32> to vector<1x1xf32>
    %57 = tpu.iota {dimensions = array<i32: 0>} : vector<3x16xi32>
    %c0_i32 = arith.constant 0 : i32
    %58 = vector.broadcast %c0_i32 : i32 to vector<3x16xi32>
    %59 = arith.cmpi eq, %57, %58 : vector<3x16xi32>
    %c1_i32 = arith.constant 1 : i32
    %60 = vector.broadcast %c1_i32 : i32 to vector<3x16xi32>
    %61 = arith.cmpi eq, %57, %60 : vector<3x16xi32>
    %62 = vector.shape_cast %31 : vector<1x16xf32> to vector<1x16xf32>
    %63 = vector.broadcast %62 : vector<1x16xf32> to vector<3x16xf32>
    %64 = vector.shape_cast %43 : vector<1x16xf32> to vector<1x16xf32>
    %65 = vector.broadcast %64 : vector<1x16xf32> to vector<3x16xf32>
    %66 = arith.select %61, %63, %65 : vector<3x16xi1>, vector<3x16xf32>
    %67 = vector.shape_cast %19 : vector<1x16xf32> to vector<1x16xf32>
    %68 = vector.broadcast %67 : vector<1x16xf32> to vector<3x16xf32>
    %69 = arith.select %59, %68, %66 : vector<3x16xi1>, vector<3x16xf32>
    %c0_28 = arith.constant 0 : index
    %c0_29 = arith.constant 0 : index
    %c0_30 = arith.constant 0 : index
    %70 = vector.load %arg8[%c0_28, %c0_29, %c0_30] : memref<1x3x16xf32, #tpu.memory_space<vmem>>, vector<1x3x16xf32>
    %71 = vector.shape_cast %70 : vector<1x3x16xf32> to vector<3x16xf32>
    %72 = vector.shape_cast %69 : vector<3x16xf32> to vector<1x3x16xf32>
    tpu.vector_store %arg8[%c0_28, %c0_29, %c0_30], %72 {strides = array<i32>} : memref<1x3x16xf32, #tpu.memory_space<vmem>>, vector<1x3x16xf32>,
    %73 = tpu.iota {dimensions = array<i32: 1>} : vector<1x128xi32>
    %c0_i32_31 = arith.constant 0 : i32
    %74 = vector.broadcast %c0_i32_31 : i32 to vector<1x128xi32>
    %75 = arith.cmpi eq, %73, %74 : vector<1x128xi32>
    %cst_32 = arith.constant 0.000000e+00 : f32
    %76 = vector.shape_cast %7 : vector<1x1xf32> to vector<1x1xf32>
    %77 = vector.broadcast %76 : vector<1x1xf32> to vector<1x128xf32>
    %78 = vector.broadcast %cst_32 : f32 to vector<1x128xf32>
    %79 = arith.select %75, %77, %78 : vector<1x128xi1>, vector<1x128xf32>
    %c1_i32_33 = arith.constant 1 : i32
    %80 = vector.broadcast %c1_i32_33 : i32 to vector<1x128xi32>
    %81 = arith.cmpi eq, %73, %80 : vector<1x128xi32>
    %cst_34 = arith.constant 0.000000e+00 : f32
    %82 = vector.shape_cast %52 : vector<1x1xf32> to vector<1x1xf32>
    %83 = vector.broadcast %82 : vector<1x1xf32> to vector<1x128xf32>
    %84 = vector.broadcast %cst_34 : f32 to vector<1x128xf32>
    %85 = arith.select %81, %83, %84 : vector<1x128xi1>, vector<1x128xf32>
    %86 = arith.addf %79, %85 : vector<1x128xf32>
    %c2_i32 = arith.constant 2 : i32
    %87 = vector.broadcast %c2_i32 : i32 to vector<1x128xi32>
    %88 = arith.cmpi eq, %73, %87 : vector<1x128xi32>
    %cst_35 = arith.constant 0.000000e+00 : f32
    %89 = vector.shape_cast %56 : vector<1x1xf32> to vector<1x1xf32>
    %90 = vector.broadcast %89 : vector<1x1xf32> to vector<1x128xf32>
    %91 = vector.broadcast %cst_35 : f32 to vector<1x128xf32>
    %92 = arith.select %88, %90, %91 : vector<1x128xi1>, vector<1x128xf32>
    %93 = arith.addf %86, %92 : vector<1x128xf32>
    %c0_36 = arith.constant 0 : index
    %c0_37 = arith.constant 0 : index
    %c0_38 = arith.constant 0 : index
    %94 = vector.load %arg9[%c0_36, %c0_37, %c0_38] : memref<1x1x128xf32, #tpu.memory_space<vmem>>, vector<1x1x128xf32>
    %95 = vector.shape_cast %94 : vector<1x1x128xf32> to vector<1x128xf32>
    %96 = vector.shape_cast %93 : vector<1x128xf32> to vector<1x1x128xf32>
    tpu.vector_store %arg9[%c0_36, %c0_37, %c0_38], %96 {strides = array<i32>} : memref<1x1x128xf32, #tpu.memory_space<vmem>>, vector<1x1x128xf32>,
    return
  }
  func.func @transform_0(%arg0: i32) -> (i32, i32) {
    %c0_i32 = arith.constant 0 : i32
    %c0_i32_0 = arith.constant 0 : i32
    return %arg0, %c0_i32 : i32, i32
  }
  func.func @transform_1(%arg0: i32) -> (i32, i32) {
    %c0_i32 = arith.constant 0 : i32
    %c0_i32_0 = arith.constant 0 : i32
    return %arg0, %c0_i32 : i32, i32
  }
  func.func @transform_2(%arg0: i32) -> (i32, i32) {
    %c0_i32 = arith.constant 0 : i32
    %c0_i32_0 = arith.constant 0 : i32
    return %arg0, %c0_i32 : i32, i32
  }
  func.func @transform_3(%arg0: i32) -> (i32, i32) {
    %c0_i32 = arith.constant 0 : i32
    %c0_i32_0 = arith.constant 0 : i32
    return %arg0, %c0_i32 : i32, i32
  }
  func.func @transform_4(%arg0: i32) -> (i32, i32) {
    %c0_i32 = arith.constant 0 : i32
    %c0_i32_0 = arith.constant 0 : i32
    return %arg0, %c0_i32 : i32, i32
  }
  func.func @transform_5(%arg0: i32) -> (i32, i32) {
    %c0_i32 = arith.constant 0 : i32
    %c0_i32_0 = arith.constant 0 : i32
    %c0_i32_1 = arith.constant 0 : i32
    return %c0_i32, %c0_i32_0 : i32, i32
  }
  func.func @transform_6(%arg0: i32) -> (i32, i32) {
    %c0_i32 = arith.constant 0 : i32
    %c0_i32_0 = arith.constant 0 : i32
    %c0_i32_1 = arith.constant 0 : i32
    return %c0_i32, %c0_i32_0 : i32, i32
  }
  func.func @transform_7(%arg0: i32) -> (i32, i32, i32) {
    %c0_i32 = arith.constant 0 : i32
    %c0_i32_0 = arith.constant 0 : i32
    %c0_i32_1 = arith.constant 0 : i32
    return %arg0, %c0_i32, %c0_i32_0 : i32, i32, i32
  }
  func.func @transform_8(%arg0: i32) -> (i32, i32, i32) {
    %c0_i32 = arith.constant 0 : i32
    %c0_i32_0 = arith.constant 0 : i32
    %c0_i32_1 = arith.constant 0 : i32
    return %arg0, %c0_i32, %c0_i32_0 : i32, i32, i32
  }
}

</mosaic_0001>

<llo_original>
// kernel: combined_loss.1
$region0: #{combined_loss.1}
  #allocation0 [shape = 'u32[]', space=smem, size = 0x4, offset = 0x4, fixed_abs, tag = 'smem constant byte address 0x4 - core index']
  #allocation1 [shape = 'u32[144,128]{1,0:T(1,128)}', space=vmem, size = 0x12000, scoped, tag = 'internal scratch']
  %s0 = inlined_call_operand.vmem [shape: f32[16,24], index: 0, kind: input, shape index: {}]
  %s1 = inlined_call_operand.vmem [shape: f32[16,24], index: 1, kind: input, shape index: {}]
  %s2 = inlined_call_operand.vmem [shape: bf16[16,32], index: 2, kind: input, shape index: {}]
  %s3 = inlined_call_operand.vmem [shape: bf16[16,32], index: 3, kind: input, shape index: {}]
  %s4 = inlined_call_operand.vmem [shape: bf16[16,32], index: 4, kind: input, shape index: {}]
  %s5 = inlined_call_operand.vmem [shape: bf16[32,16], index: 5, kind: input, shape index: {}]
  %s6 = inlined_call_operand.vmem [shape: bf16[32,16], index: 6, kind: input, shape index: {}]
  %s7 = inlined_call_operand.vmem [shape: f32[1,3,16], index: 7, kind: output, shape index: {0}]
  %s8 = inlined_call_operand.vmem [shape: f32[1,1,128], index: 8, kind: output, shape index: {1}]
  %9 = xla_tuple %s7, %s8
  %s10 = sld [smem:[#allocation0]]
  $region46: #{combined_loss.1} parent=0
    _
  %s12 = ssub.s32 1, %s10
  %s13 = scalar_select 0, %s12, %s10
  // Predicated region
  $region2: #{combined_loss.1} parent=0 // pred_check
    _
  $region3: #{combined_loss.1} parent=0 // pred_check_branch
    %15 = sbr.rel (0) target = $region5
  $region4: #{combined_loss.1} parent=0 // pred_region
    _
  $region5: #{combined_loss.1} parent=0 // pred_fallthru
    _
  // Predicated region
  $region6: #{combined_loss.1} parent=0 // pred_check
    _
  $region7: #{combined_loss.1} parent=0 // pred_check_branch
    %17 = sbr.rel (0) target = $region9
  $region8: #{combined_loss.1} parent=0 // pred_region
    _
  $region9: #{combined_loss.1} parent=0 // pred_fallthru
    _
  // Predicated region
  $region10: #{combined_loss.1} parent=0 // pred_check
    _
  $region11: #{combined_loss.1} parent=0 // pred_check_branch
    %19 = sbr.rel (0) target = $region13
  $region12: #{combined_loss.1} parent=0 // pred_region
    _
  $region13: #{combined_loss.1} parent=0 // pred_fallthru
    _
  // Predicated region
  $region14: #{combined_loss.1} parent=0 // pred_check
    _
  $region15: #{combined_loss.1} parent=0 // pred_check_branch
    %21 = sbr.rel (0) target = $region17
  $region16: #{combined_loss.1} parent=0 // pred_region
    _
  $region17: #{combined_loss.1} parent=0 // pred_fallthru
    _
  // Predicated region
  $region18: #{combined_loss.1} parent=0 // pred_check
    _
  $region19: #{combined_loss.1} parent=0 // pred_check_branch
    %23 = sbr.rel (0) target = $region21
  $region20: #{combined_loss.1} parent=0 // pred_region
    _
  $region21: #{combined_loss.1} parent=0 // pred_fallthru
    _
  // Predicated region
  $region22: #{combined_loss.1} parent=0 // pred_check
    _
  $region23: #{combined_loss.1} parent=0 // pred_check_branch
    %25 = sbr.rel (0) target = $region25
  $region24: #{combined_loss.1} parent=0 // pred_region
    _
  $region25: #{combined_loss.1} parent=0 // pred_fallthru
    _
  // Predicated region
  $region26: #{combined_loss.1} parent=0 // pred_check
    _
  $region27: #{combined_loss.1} parent=0 // pred_check_branch
    %27 = sbr.rel (0) target = $region29
  $region28: #{combined_loss.1} parent=0 // pred_region
    _
  $region29: #{combined_loss.1} parent=0 // pred_fallthru
    _
  %v29 = vld [vmem:[%s0] sm:$0xff]
  %v30 = vld [vmem:[%s0 + $0x8] sm:$0xff]
  %v31 = vld [vmem:[%s1] sm:$0xff]
  %v32 = vld [vmem:[%s1 + $0x8] sm:$0xff]
  %v33 = vsub.f32 %v29, %v31
  %v34 = vsub.f32 %v30, %v32
  %v35 = vmul.f32 %v33, %v33
  %v36 = vmul.f32 %v34, %v34
  %vm37 = vcmask 195584
  %v38 = vsel %vm37, %v35, 0.0
  %39 = vadd.xlane.f32.xlu0 %v38
  %v40 = vpop.xlane.xlu0 %39
  %v41 = vsel %vm37, %v36, 0.0
  %42 = vadd.xlane.f32.xlu0 %v41
  %v43 = vpop.xlane.xlu0 %42
  %v44 = vadd.f32 %v40, %v43
  %v45 = vrot.slane %v44, 4
  %v46 = vadd.f32 %v44, %v45
  %v47 = vrot.slane %v46, 2
  %v48 = vadd.f32 %v46, %v47
  %v49 = vrot.slane %v48, 1
  %v50 = vadd.f32 %v48, %v49
  %v51 = vld [vmem:[%s2] sm:$0xf]
  %v52 = vld [vmem:[%s2 + $0x4] sm:$0xf]
  %v53 = vld [vmem:[%s3] sm:$0xf]
  %v54 = vld [vmem:[%s3 + $0x4] sm:$0xf]
  %v55 = vld [vmem:[%s4] sm:$0xf]
  %v56 = vld [vmem:[%s4 + $0x4] sm:$0xf]
  %v57 = vld [vmem:[%s5] sm:$0xf]
  %v58 = vld [vmem:[%s5 + $0x4] sm:$0xf]
  %v59 = vld [vmem:[%s5 + $0x8] sm:$0xf]
  %v60 = vld [vmem:[%s5 + $0xc] sm:$0xf]
  %v61 = vld [vmem:[%s6] sm:$0xf]
  %v62 = vld [vmem:[%s6 + $0x4] sm:$0xf]
  %v63 = vld [vmem:[%s6 + $0x8] sm:$0xf]
  %v64 = vld [vmem:[%s6 + $0xc] sm:$0xf]
  %v67 = vunpack.c.l.b16 %v51
  %v68 = vunpack.c.l.b16 %v52
  %v69 = vpack.c.b16 %v68, %v67
  %v74 = vunpack.c.l.b16 %v57
  %v75 = vunpack.c.l.b16 %v58
  %v76 = vunpack.c.l.b16 %v59
  %v77 = vunpack.c.l.b16 %v60
  %v78 = vpack.c.b16 %v75, %v74
  %v79 = vpack.c.b16 %v77, %v76
  %vm82 = vcmask 261120
  %v84 = vsel %vm82, %v69, 0
  %86 = vmatprep.subr.bf16.mxu0 0
  %87 = vmatpush1.bf16.msra.mxu0 %v78
  %88 = vmatprep.subr.bf16.mxu0 0
  %89 = vmatpush1.bf16.msra.mxu0 %v79
  %90 = vmatprep.subr.bf16.mxu0 0
  %91 = vmatpush1.bf16.msra.mxu0 0
  %92 = vmatprep.subr.bf16.mxu0 0
  %93 = vmatpush1.bf16.msra.mxu0 0
  %94 = vmatprep.subr.bf16.mxu0 0
  %95 = vmatpush1.bf16.msra.mxu0 0
  %96 = vmatprep.subr.bf16.mxu0 0
  %97 = vmatpush1.bf16.msra.mxu0 0
  %98 = vmatprep.subr.bf16.mxu0 0
  %99 = vmatpush1.bf16.msra.mxu0 0
  %100 = vmatprep.subr.bf16.mxu0 0
  %101 = vmatpush1.bf16.msra.mxu0 0
  %102 = vmatprep.subr.bf16.mxu0 0
  %103 = vmatpush1.bf16.msra.mxu0 0
  %104 = vmatprep.subr.bf16.mxu0 0
  %105 = vmatpush1.bf16.msra.mxu0 0
  %106 = vmatprep.subr.bf16.mxu0 0
  %107 = vmatpush1.bf16.msra.mxu0 0
  %108 = vmatprep.subr.bf16.mxu0 0
  %109 = vmatpush1.bf16.msra.mxu0 0
  %110 = vmatprep.subr.bf16.mxu0 0
  %111 = vmatpush1.bf16.msra.mxu0 0
  %112 = vmatprep.subr.bf16.mxu0 0
  %113 = vmatpush1.bf16.msra.mxu0 0
  %114 = vmatprep.subr.bf16.mxu0 0
  %115 = vmatpush1.bf16.msra.mxu0 0
  %116 = vmatprep.subr.bf16.mxu0 0
  %117 = vmatpush1.bf16.msra.mxu0 0
  %118 = vmatprep.mubr.bf16.mxu0 0
  %119 = vmatmul.mubr.bf16.gmra.mrb[0].mxu0 %v84
  %v120 = vpop.f32.mrb[0].mxu0
  %v121 = vadd.f32 0.0, %v120
  %v122 = vpop.f32.mrb[0].mxu0
  %v123 = vpop.f32.mrb[0].mxu0
  %v124 = vadd.f32 0.0, %v123
  %v125 = vpop.f32.mrb[0].mxu0
  %126 = vdwg.mxu0
  %v127 = vmul.f32 %v121, 1.442695
  %v128 = vpow.pop %v127
  %v129 = vmul.f32 %v124, 1.442695
  %v130 = vpow.pop %v129
  %vm131 = vcmask 130048
  %v132 = vsel %vm131, %v128, 0.0
  %133 = vadd.xlane.f32.xlu0 %v132
  %v134 = vpop.xlane.xlu0 %133
  %v135 = vsel %vm131, %v130, 0.0
  %136 = vadd.xlane.f32.xlu0 %v135
  %v137 = vpop.xlane.xlu0 %136
  %v138 = vlog2.pop %v134
  %v139 = vmul.f32 %v138, 0.6931472
  %v140 = vlog2.pop %v137
  %v141 = vmul.f32 %v140, 0.6931472
  %v142 = vadd.f32 %v132, %v135
  %v143 = vrot.slane %v142, 4
  %v144 = vadd.f32 %v142, %v143
  %v145 = vrot.slane %v144, 2
  %v146 = vadd.f32 %v144, %v145
  %v147 = vrot.slane %v146, 1
  %v148 = vadd.f32 %v146, %v147
  %v149 = vunpack.c.l.bf16 %v51
  %v150 = vunpack.c.l.bf16 %v52
  %v151 = vunpack.c.l.bf16 %v53
  %v152 = vunpack.c.l.bf16 %v54
  %v153 = vmul.f32 %v149, %v151
  %v154 = vmul.f32 %v150, %v152
  %v155 = vsel %vm82, %v153, 0.0
  %156 = vadd.xlane.f32.xlu0 %v155
  %v157 = vpop.xlane.xlu0 %156
  %v158 = vsel %vm82, %v154, 0.0
  %159 = vadd.xlane.f32.xlu0 %v158
  %v160 = vpop.xlane.xlu0 %159
  %v165 = vunpack.c.l.b16 %v61
  %v166 = vunpack.c.l.b16 %v62
  %v167 = vunpack.c.l.b16 %v63
  %v168 = vunpack.c.l.b16 %v64
  %v169 = vpack.c.b16 %v166, %v165
  %v170 = vpack.c.b16 %v168, %v167
  %173 = vmatprep.subr.bf16.mxu0 0
  %174 = vmatpush1.bf16.msra.mxu0 %v169
  %175 = vmatprep.subr.bf16.mxu0 0
  %176 = vmatpush1.bf16.msra.mxu0 %v170
  %177 = vmatprep.subr.bf16.mxu0 0
  %178 = vmatpush1.bf16.msra.mxu0 0
  %179 = vmatprep.subr.bf16.mxu0 0
  %180 = vmatpush1.bf16.msra.mxu0 0
  %181 = vmatprep.subr.bf16.mxu0 0
  %182 = vmatpush1.bf16.msra.mxu0 0
  %183 = vmatprep.subr.bf16.mxu0 0
  %184 = vmatpush1.bf16.msra.mxu0 0
  %185 = vmatprep.subr.bf16.mxu0 0
  %186 = vmatpush1.bf16.msra.mxu0 0
  %187 = vmatprep.subr.bf16.mxu0 0
  %188 = vmatpush1.bf16.msra.mxu0 0
  %189 = vmatprep.subr.bf16.mxu0 0
  %190 = vmatpush1.bf16.msra.mxu0 0
  %191 = vmatprep.subr.bf16.mxu0 0
  %192 = vmatpush1.bf16.msra.mxu0 0
  %193 = vmatprep.subr.bf16.mxu0 0
  %194 = vmatpush1.bf16.msra.mxu0 0
  %195 = vmatprep.subr.bf16.mxu0 0
  %196 = vmatpush1.bf16.msra.mxu0 0
  %197 = vmatprep.subr.bf16.mxu0 0
  %198 = vmatpush1.bf16.msra.mxu0 0
  %199 = vmatprep.subr.bf16.mxu0 0
  %200 = vmatpush1.bf16.msra.mxu0 0
  %201 = vmatprep.subr.bf16.mxu0 0
  %202 = vmatpush1.bf16.msra.mxu0 0
  %203 = vmatprep.subr.bf16.mxu0 0
  %204 = vmatpush1.bf16.msra.mxu0 0
  %205 = vmatprep.mubr.bf16.mxu0 0
  %206 = vmatmul.mubr.bf16.gmra.mrb[0].mxu0 %v84
  %v207 = vpop.f32.mrb[0].mxu0
  %v208 = vadd.f32 0.0, %v207
  %v209 = vpop.f32.mrb[0].mxu0
  %v210 = vpop.f32.mrb[0].mxu0
  %v211 = vadd.f32 0.0, %v210
  %v212 = vpop.f32.mrb[0].mxu0
  %213 = vdwg.mxu0
  %v214 = vmul.f32 %v208, 1.442695
  %v215 = vpow.pop %v214
  %v216 = vmul.f32 %v211, 1.442695
  %v217 = vpow.pop %v216
  %v218 = vsel %vm131, %v215, 0.0
  %219 = vadd.xlane.f32.xlu0 %v218
  %v220 = vpop.xlane.xlu0 %219
  %v221 = vsel %vm131, %v217, 0.0
  %222 = vadd.xlane.f32.xlu0 %v221
  %v223 = vpop.xlane.xlu0 %222
  %v224 = vlog2.pop %v220
  %v225 = vmul.f32 %v224, 0.6931472
  %v226 = vlog2.pop %v223
  %v227 = vmul.f32 %v226, 0.6931472
  %v228 = vadd.f32 %v218, %v221
  %v229 = vrot.slane %v228, 4
  %v230 = vadd.f32 %v228, %v229
  %v231 = vrot.slane %v230, 2
  %v232 = vadd.f32 %v230, %v231
  %v233 = vrot.slane %v232, 1
  %v234 = vadd.f32 %v232, %v233
  %v235 = vunpack.c.l.bf16 %v55
  %v236 = vunpack.c.l.bf16 %v56
  %v237 = vmul.f32 %v149, %v235
  %v238 = vmul.f32 %v150, %v236
  %v239 = vsel %vm82, %v237, 0.0
  %240 = vadd.xlane.f32.xlu0 %v239
  %v241 = vpop.xlane.xlu0 %240
  %v242 = vsel %vm82, %v238, 0.0
  %243 = vadd.xlane.f32.xlu0 %v242
  %v244 = vpop.xlane.xlu0 %243
  %v247 = vunpack.c.l.b16 %v53
  %v248 = vunpack.c.l.b16 %v54
  %v249 = vpack.c.b16 %v248, %v247
  %v251 = vsel %vm82, %v249, 0
  %253 = vmatprep.subr.bf16.mxu0 0
  %254 = vmatpush1.bf16.msra.mxu0 %v169
  %255 = vmatprep.subr.bf16.mxu0 0
  %256 = vmatpush1.bf16.msra.mxu0 %v170
  %257 = vmatprep.subr.bf16.mxu0 0
  %258 = vmatpush1.bf16.msra.mxu0 0
  %259 = vmatprep.subr.bf16.mxu0 0
  %260 = vmatpush1.bf16.msra.mxu0 0
  %261 = vmatprep.subr.bf16.mxu0 0
  %262 = vmatpush1.bf16.msra.mxu0 0
  %263 = vmatprep.subr.bf16.mxu0 0
  %264 = vmatpush1.bf16.msra.mxu0 0
  %265 = vmatprep.subr.bf16.mxu0 0
  %266 = vmatpush1.bf16.msra.mxu0 0
  %267 = vmatprep.subr.bf16.mxu0 0
  %268 = vmatpush1.bf16.msra.mxu0 0
  %269 = vmatprep.subr.bf16.mxu0 0
  %270 = vmatpush1.bf16.msra.mxu0 0
  %271 = vmatprep.subr.bf16.mxu0 0
  %272 = vmatpush1.bf16.msra.mxu0 0
  %273 = vmatprep.subr.bf16.mxu0 0
  %274 = vmatpush1.bf16.msra.mxu0 0
  %275 = vmatprep.subr.bf16.mxu0 0
  %276 = vmatpush1.bf16.msra.mxu0 0
  %277 = vmatprep.subr.bf16.mxu0 0
  %278 = vmatpush1.bf16.msra.mxu0 0
  %279 = vmatprep.subr.bf16.mxu0 0
  %280 = vmatpush1.bf16.msra.mxu0 0
  %281 = vmatprep.subr.bf16.mxu0 0
  %282 = vmatpush1.bf16.msra.mxu0 0
  %283 = vmatprep.subr.bf16.mxu0 0
  %284 = vmatpush1.bf16.msra.mxu0 0
  %285 = vmatprep.mubr.bf16.mxu0 0
  %286 = vmatmul.mubr.bf16.gmra.mrb[0].mxu0 %v251
  %v287 = vpop.f32.mrb[0].mxu0
  %v288 = vadd.f32 0.0, %v287
  %v289 = vpop.f32.mrb[0].mxu0
  %v290 = vpop.f32.mrb[0].mxu0
  %v291 = vadd.f32 0.0, %v290
  %v292 = vpop.f32.mrb[0].mxu0
  %293 = vdwg.mxu0
  %v294 = vmul.f32 %v288, 1.442695
  %v295 = vpow.pop %v294
  %v296 = vmul.f32 %v291, 1.442695
  %v297 = vpow.pop %v296
  %v298 = vsel %vm131, %v295, 0.0
  %299 = vadd.xlane.f32.xlu0 %v298
  %v300 = vpop.xlane.xlu0 %299
  %v301 = vsel %vm131, %v297, 0.0
  %302 = vadd.xlane.f32.xlu0 %v301
  %v303 = vpop.xlane.xlu0 %302
  %v304 = vlog2.pop %v300
  %v305 = vmul.f32 %v304, 0.6931472
  %v306 = vlog2.pop %v303
  %v307 = vmul.f32 %v306, 0.6931472
  %v308 = vadd.f32 %v298, %v301
  %v309 = vrot.slane %v308, 4
  %v310 = vadd.f32 %v308, %v309
  %v311 = vrot.slane %v310, 2
  %v312 = vadd.f32 %v310, %v311
  %v313 = vrot.slane %v312, 1
  %v314 = vadd.f32 %v312, %v313
  %v315 = vmul.f32 %v151, %v235
  %v316 = vmul.f32 %v152, %v236
  %v317 = vsel %vm82, %v315, 0.0
  %318 = vadd.xlane.f32.xlu0 %v317
  %v319 = vpop.xlane.xlu0 %318
  %v320 = vsel %vm82, %v316, 0.0
  %321 = vadd.xlane.f32.xlu0 %v320
  %v322 = vpop.xlane.xlu0 %321
  %v323 = vadd.f32 %v139, %v225
  %v324 = vadd.f32 %v141, %v227
  %v325 = vadd.f32 %v323, %v305
  %v326 = vadd.f32 %v324, %v307
  %v327 = vadd.f32 %v325, %v326
  %v328 = vrot.slane %v327, 4
  %v329 = vadd.f32 %v327, %v328
  %v330 = vrot.slane %v329, 2
  %v331 = vadd.f32 %v329, %v330
  %v332 = vrot.slane %v331, 1
  %v333 = vadd.f32 %v331, %v332
  %v334 = vadd.f32 %v157, %v241
  %v335 = vadd.f32 %v160, %v244
  %v336 = vadd.f32 %v334, %v319
  %v337 = vadd.f32 %v335, %v322
  %v338 = vadd.f32 %v336, %v337
  %v339 = vrot.slane %v338, 4
  %v340 = vadd.f32 %v338, %v339
  %v341 = vrot.slane %v340, 2
  %v342 = vadd.f32 %v340, %v341
  %v343 = vrot.slane %v342, 1
  %v344 = vadd.f32 %v342, %v343
  %v345 = vlaneseq
  %v346 = vshrl.u32 %v345, 7
  %vm347 = vcmp.eq.s32.totalorder %v346, 0
  %vm348 = vcmp.eq.s32.totalorder %v346, 1
  %v349 = vsel %vm348, %v234, %v314
  %v350 = vsel %vm347, %v148, %v349
  %vm351 = vcmask 124928
  %352 = vst.msk [vmem:[%s7] sm:$0x7] %vm351, %v350
  %v353 = vlaneseq
  %v354 = vand.u32 %v353, 127
  %vm355 = vcmp.eq.s32.totalorder %v354, 0
  %v356 = vsel %vm355, %v50, 0.0
  %vm357 = vcmp.eq.s32.totalorder %v354, 1
  %v358 = vsel %vm357, %v333, 0.0
  %v359 = vadd.f32 %v356, %v358
  %vm360 = vcmp.eq.s32.totalorder %v354, 2
  %v361 = vsel %vm360, %v344, 0.0
  %v362 = vadd.f32 %v359, %v361
  %363 = vst [vmem:[%s8] sm:$0x1] %v362
  // Predicated region
  $region30: #{combined_loss.1} parent=0 // pred_check
    _
  $region31: #{combined_loss.1} parent=0 // pred_check_branch
    %365 = sbr.rel (0) target = $region33
  $region32: #{combined_loss.1} parent=0 // pred_region
    _
  $region33: #{combined_loss.1} parent=0 // pred_fallthru
    _
  // Predicated region
  $region34: #{combined_loss.1} parent=0 // pred_check
    _
  $region35: #{combined_loss.1} parent=0 // pred_check_branch
    %367 = sbr.rel (0) target = $region37
  $region36: #{combined_loss.1} parent=0 // pred_region
    _
  $region37: #{combined_loss.1} parent=0 // pred_fallthru
    _
  // Predicated region
  $region38: #{combined_loss.1} parent=0 // pred_check
    _
  $region39: #{combined_loss.1} parent=0 // pred_check_branch
    %369 = sbr.rel (0) target = $region41
  $region40: #{combined_loss.1} parent=0 // pred_region
    _
  $region41: #{combined_loss.1} parent=0 // pred_fallthru
    _
  // Predicated region
  $region42: #{combined_loss.1} parent=0 // pred_check
    _
  $region43: #{combined_loss.1} parent=0 // pred_check_branch
    %371 = sbr.rel (0) target = $region45
  $region44: #{combined_loss.1} parent=0 // pred_region
    _
  $region45: #{combined_loss.1} parent=0 // pred_fallthru
    _

</llo_original>
